<compile_context>
chip_gen: v7x
topology: tpu7x:2x2x1
jax: 0.10.0
libtpu: 0.0.40
codegen_flags: <defaults>
</compile_context>

<pallas_src>
import numpy as np
import jax
import jax.numpy as jnp
from jax.experimental import pallas as pl
from jax.experimental.pallas import tpu as pltpu

N_KP = 6       # keypoints / graph nodes per image
IN_DIM = 2     # (x, y) per node
HIDDEN = 64    # VanillaGNN hidden_dim
OUT_DIM = 2    # VanillaGNN output_dim

OUT_LANES = 128          # lane-dense output width (cols 0..1 meaningful)
W2_ROW0 = 8              # w2 starts on a sublane-aligned row of the slab
SLAB_ROWS = W2_ROW0 + HIDDEN   # 72 rows total in the packed param slab
TARGET_TM = 384          # target rows per grid step (>=256 for v6e/v7x MXU)


# ----------------------------- Pallas kernel -------------------------------
def _gnn_kernel(x_ref, w_ref, o_ref):
    # x_ref: (TM, 2)    raw ring-aggregated keypoints (no wrapper padding)
    # w_ref: (72, 128)  packed f32 param slab:
    #           rows 0..1 , lanes 0..63   -> fc1 weight (2, 64)
    #           row  2    , lanes 0..63   -> fc1 bias   (64,)
    #           row  3    , lanes 0..1    -> fc2 bias   (2,)  lane-padded to 128
    #           rows 8..71, lanes 0..127  -> fc2 weight (64, 2) lane-padded
    # o_ref: (TM, 128)  lane-dense output tile; lanes 0..1 meaningful.
    x = x_ref[...]                                   # (TM, 2)
    w1r0 = w_ref[0:1, 0:HIDDEN]                      # (1, 64)
    w1r1 = w_ref[1:2, 0:HIDDEN]                      # (1, 64)
    b1 = w_ref[2:3, 0:HIDDEN]                        # (1, 64)
    b2 = w_ref[3:4, :]                               # (1, 128)
    w2 = w_ref[W2_ROW0:W2_ROW0 + HIDDEN, :]          # (64, 128), sublane-aligned

    # fc1 (K = 2): two VPU rank-1 updates instead of a ~99%-masked MXU matmul.
    h = x[:, 0:1] * w1r0 + x[:, 1:2] * w1r1 + b1     # (TM, 64)
    h = jnp.maximum(h, 0.0)                          # ReLU

    # fc2 on the MXU with f32 accumulation; lane-dense (TM, 128) store.
    o_ref[...] = jnp.dot(h, w2, preferred_element_type=jnp.float32) + b2


def _pick_batch_grid(m_rows):
    """Largest row-tile >= TARGET_TM that evenly divides M with 8-row alignment."""
    nb_start = max(1, m_rows // TARGET_TM)
    for nb in range(nb_start, 0, -1):
        tm = m_rows // nb
        if m_rows % nb == 0 and (tm % 8 == 0 or nb == 1):
            return nb
    return 1


def vanilla_gnn_pallas(agg_nodes, param_slab):
    """agg_nodes: (B, 6, 2) f32 already graph-aggregated -> (B, 6, 2) f32."""
    b = agg_nodes.shape[0]
    m_rows = b * N_KP
    x = agg_nodes.reshape(m_rows, IN_DIM)            # raw (M, 2) — no zero pad
    nb = _pick_batch_grid(m_rows)
    tm = m_rows // nb

    out_pad = pl.pallas_call(
        _gnn_kernel,
        out_shape=jax.ShapeDtypeStruct((m_rows, OUT_LANES), jnp.float32),
        grid=(nb,),
        in_specs=[
            pl.BlockSpec((tm, IN_DIM), lambda i: (i, 0)),           # batch tiles
            pl.BlockSpec((SLAB_ROWS, OUT_LANES), lambda i: (0, 0)),  # resident slab
        ],
        out_specs=pl.BlockSpec((tm, OUT_LANES), lambda i: (i, 0)),
        compiler_params=pltpu.CompilerParams(
            dimension_semantics=("parallel",)),      # v7x: 2 TCs split batch tiles
    )(x, param_slab)

    return out_pad[:, :OUT_DIM].reshape(b, N_KP, OUT_DIM)


# ------------------------------ JAX glue ------------------------------------
def get_edge_features():
    # Same fixed ring graph as CombinedModel.get_edge_features().
    return np.array([[0, 1], [1, 2], [2, 3], [3, 4], [4, 5], [5, 0]],
                    dtype=np.int32)


def complete_missing_keypoints(keypoints, labels, num_expected_keypoints=6):
    # In the reference, when exactly 6 keypoints are detected this is identity.
    # TODO(synk): the "fill missing labels with the mean keypoint" branch is
    # data-dependent Python control flow over a variable-length detection list;
    # only the full-6-detections case is exercised here.
    del labels, num_expected_keypoints
    return keypoints


def surrogate_detector(images):
    # TODO(synk): torchvision keypointrcnn_resnet50_fpn (ResNet50-FPN detector +
    # NMS post-processing) has no clean Pallas equivalent; replaced with a
    # deterministic per-image surrogate deriving 6 (x, y, score) keypoints from
    # image statistics (plain JAX glue feeding the Pallas GNN kernel).
    b, _, h, w = images.shape
    flat = images.reshape(b, -1)
    stats = jnp.stack([
        flat.mean(axis=1), flat.std(axis=1), flat.max(axis=1), flat.min(axis=1),
        jnp.abs(flat).mean(axis=1), (flat ** 2).mean(axis=1),
    ], axis=1)                                                   # (B, 6)
    smin = stats.min(axis=1, keepdims=True)
    smax = stats.max(axis=1, keepdims=True)
    xs = (stats - smin) / (smax - smin + 1e-6) * (w - 1)         # (B, 6)
    ys = jnp.flip(xs, axis=1) / (w - 1) * (h - 1)                # (B, 6)
    scores = jnp.ones_like(xs)
    return jnp.stack([xs, ys, scores], axis=2)                   # (B, 6, 3)


def init_params(key):
    # Deterministic init mimicking nn.Linear's U(-1/sqrt(fan_in), +1/sqrt(fan_in)).
    k1, k2, k3, k4 = jax.random.split(key, 4)
    lim1 = 1.0 / jnp.sqrt(jnp.float32(IN_DIM))
    lim2 = 1.0 / jnp.sqrt(jnp.float32(HIDDEN))
    return {
        "w1": jax.random.uniform(k1, (IN_DIM, HIDDEN), jnp.float32, -lim1, lim1),
        "b1": jax.random.uniform(k2, (HIDDEN,), jnp.float32, -lim1, lim1),
        "w2": jax.random.uniform(k3, (HIDDEN, OUT_DIM), jnp.float32, -lim2, lim2),
        "b2": jax.random.uniform(k4, (OUT_DIM,), jnp.float32, -lim2, lim2),
    }


def pack_params(params):
    """One-time packing of all GNN weights/biases into a single (72,128) slab."""
    slab = jnp.zeros((SLAB_ROWS, OUT_LANES), jnp.float32)
    slab = slab.at[0:IN_DIM, :HIDDEN].set(params["w1"])
    slab = slab.at[2, :HIDDEN].set(params["b1"])
    slab = slab.at[3, :OUT_DIM].set(params["b2"])
    slab = slab.at[W2_ROW0:W2_ROW0 + HIDDEN, :OUT_DIM].set(params["w2"])
    return slab


def combined_model_forward(images, param_slab):
    """Inference branch of CombinedModel.forward (train=False), batched over images."""
    kps3 = surrogate_detector(images)                 # (B, 6, 3) best-per-label kps
    labels = jnp.arange(1, N_KP + 1)
    kps3 = complete_missing_keypoints(kps3, labels)
    keypoints = kps3[..., 0:2]                        # (B, 6, 2), drop score column
    # Fixed ring adjacency (in-degree exactly 1 per dest) folded into a roll:
    #   summed_neighbor_nodes[d] = nodes[(d - 1) mod 6]
    agg = jnp.roll(keypoints, shift=1, axis=1)        # == A @ keypoints per graph
    return vanilla_gnn_pallas(agg, param_slab)        # (B, 6, 2)


if __name__ == "__main__":
    key = jax.random.PRNGKey(0)
    k_img, k_par = jax.random.split(key)

    # Batch of small NCHW RGB images -> 128 graphs -> M = 768 GNN rows
    # (two 384-row "parallel" grid tiles).
    B = 128
    images = jax.random.uniform(k_img, (B, 3, 16, 16), jnp.float32)
    params = init_params(k_par)
    slab = pack_params(params)                        # hoisted, init-time packing

    fwd = jax.jit(combined_model_forward)
    out = jax.block_until_ready(fwd(images, slab))

    # Pure-JAX reference of the GNN head (generic per-graph scatter-add
    # aggregation) as a correctness check of the folded-adjacency + packed-slab
    # Pallas path.
    kps = surrogate_detector(images)[..., 0:2]                     # (B, 6, 2)
    edges = jnp.asarray(get_edge_features())
    agg_ref = jnp.zeros_like(kps).at[:, edges[:, 1], :].add(kps[:, edges[:, 0], :])
    h_ref = jnp.maximum(jnp.einsum("bnd,dh->bnh", agg_ref, params["w1"])
                        + params["b1"], 0.0)
    ref = jnp.einsum("bnh,ho->bno", h_ref, params["w2"]) + params["b2"]

    assert out.shape == (B, N_KP, OUT_DIM)
    assert jnp.allclose(out, ref, atol=1e-4, rtol=1e-4)

    print("KERNEL_OK")
</pallas_src>

<mosaic_0001>
module attributes {stable_mosaic.version = 11 : i64} {
  func.func @_gnn_kernel(%arg0: i32, %arg1: memref<384x2xf32, #tpu.memory_space<vmem>>, %arg2: memref<72x128xf32, #tpu.memory_space<vmem>>, %arg3: memref<384x128xf32, #tpu.memory_space<vmem>>) attributes {dimension_semantics = [#tpu.dimension_semantics<parallel>], iteration_bounds = array<i64: 2>, scalar_prefetch = 0 : i64, scratch_operands = 0 : i64, tpu.core_type = #tpu.core_type<tc>, window_params = [{transform_indices = @transform_0, window_bounds = array<i64: 384, 2>}, {pipeline_mode = #tpu.pipeline_mode<synchronous>, transform_indices = @transform_1, window_bounds = array<i64: 72, 128>}, {transform_indices = @transform_2, window_bounds = array<i64: 384, 128>}]} {
    %c0 = arith.constant 0 : index
    %c0_0 = arith.constant 0 : index
    %0 = vector.load %arg1[%c0, %c0_0] : memref<384x2xf32, #tpu.memory_space<vmem>>, vector<384x2xf32>
    %c0_1 = arith.constant 0 : index
    %c0_2 = arith.constant 0 : index
    %1 = vector.load %arg2[%c0_1, %c0_2] : memref<72x128xf32, #tpu.memory_space<vmem>>, vector<1x64xf32>
    %c1 = arith.constant 1 : index
    %c0_3 = arith.constant 0 : index
    %2 = vector.load %arg2[%c1, %c0_3] : memref<72x128xf32, #tpu.memory_space<vmem>>, vector<1x64xf32>
    %c2 = arith.constant 2 : index
    %c0_4 = arith.constant 0 : index
    %3 = vector.load %arg2[%c2, %c0_4] : memref<72x128xf32, #tpu.memory_space<vmem>>, vector<1x64xf32>
    %c3 = arith.constant 3 : index
    %c0_5 = arith.constant 0 : index
    %4 = vector.load %arg2[%c3, %c0_5] : memref<72x128xf32, #tpu.memory_space<vmem>>, vector<1x128xf32>
    %c8 = arith.constant 8 : index
    %c0_6 = arith.constant 0 : index
    %5 = vector.load %arg2[%c8, %c0_6] : memref<72x128xf32, #tpu.memory_space<vmem>>, vector<64x128xf32>
    %6 = vector.extract_strided_slice %0 {offsets = [0, 0], sizes = [384, 1], strides = [1, 1]} : vector<384x2xf32> to vector<384x1xf32>
    %7 = vector.broadcast %6 : vector<384x1xf32> to vector<384x64xf32>
    %8 = vector.broadcast %1 : vector<1x64xf32> to vector<384x64xf32>
    %9 = arith.mulf %7, %8 : vector<384x64xf32>
    %10 = vector.extract_strided_slice %0 {offsets = [0, 1], sizes = [384, 1], strides = [1, 1]} : vector<384x2xf32> to vector<384x1xf32>
    %11 = vector.broadcast %10 : vector<384x1xf32> to vector<384x64xf32>
    %12 = vector.broadcast %2 : vector<1x64xf32> to vector<384x64xf32>
    %13 = arith.mulf %11, %12 : vector<384x64xf32>
    %14 = arith.addf %9, %13 : vector<384x64xf32>
    %15 = vector.broadcast %3 : vector<1x64xf32> to vector<384x64xf32>
    %16 = arith.addf %14, %15 : vector<384x64xf32>
    %cst = arith.constant 0.000000e+00 : f32
    %17 = vector.broadcast %cst : f32 to vector<384x64xf32>
    %18 = arith.maximumf %16, %17 : vector<384x64xf32>
    %cst_7 = arith.constant dense<0.000000e+00> : vector<384x128xf32>
    %19 = tpu.matmul %18, %5, %cst_7 {dimension_numbers = #tpu.dot_dimension_numbers<[1], [0], [0], [1], [0, 0, 1, 1], [], []>} : vector<384x64xf32>, vector<64x128xf32>, vector<384x128xf32> -> vector<384x128xf32>
    %20 = vector.broadcast %4 : vector<1x128xf32> to vector<384x128xf32>
    %21 = arith.addf %19, %20 : vector<384x128xf32>
    %c0_8 = arith.constant 0 : index
    %c0_9 = arith.constant 0 : index
    %22 = vector.load %arg3[%c0_8, %c0_9] : memref<384x128xf32, #tpu.memory_space<vmem>>, vector<384x128xf32>
    tpu.vector_store %arg3[%c0_8, %c0_9], %21 {strides = array<i32>} : memref<384x128xf32, #tpu.memory_space<vmem>>, vector<384x128xf32>,
    return
  }
  func.func @transform_0(%arg0: i32) -> (i32, i32) {
    %c0_i32 = arith.constant 0 : i32
    %c0_i32_0 = arith.constant 0 : i32
    return %arg0, %c0_i32 : i32, i32
  }
  func.func @transform_1(%arg0: i32) -> (i32, i32) {
    %c0_i32 = arith.constant 0 : i32
    %c0_i32_0 = arith.constant 0 : i32
    %c0_i32_1 = arith.constant 0 : i32
    return %c0_i32, %c0_i32_0 : i32, i32
  }
  func.func @transform_2(%arg0: i32) -> (i32, i32) {
    %c0_i32 = arith.constant 0 : i32
    %c0_i32_0 = arith.constant 0 : i32
    return %arg0, %c0_i32 : i32, i32
  }
}

</mosaic_0001>

<llo_original>
// kernel: reverse
$region0: #{reverse}
  %s0 = inlined_call_operand.vmem [shape: f32[128,6], index: 0, kind: input, shape index: {}]
  %s1 = inlined_call_operand.vmem [shape: f32[128,6], index: 1, kind: output, shape index: {}]
  $region1: #{reverse} parent=0
    #allocation0 [shape = 'u8[8192]{0}', space=vmem, size = 0x2000, scoped, tag = 'operand span for operand 0']
    #allocation1 [shape = 'u8[4096]{0}', space=vmem, size = 0x1000, scoped, tag = 'operand span for operand 1']
    %s2 = scalar_lea.vmem [#allocation0], 8
    // Predicated region
    $region2: #{reverse} parent=1 // pred_check
      _
    $region3: #{reverse} parent=1 // pred_check_branch
      %4 = sbr.rel (0) target = $region5
    $region4: #{reverse} parent=1 // pred_region
      // Predicated region
      $region6: #{reverse} parent=4 // pred_check
        _
      $region7: #{reverse} parent=4 // pred_check_branch
        %6 = sbr.rel (0) target = $region9
      $region8: #{reverse} parent=4 // pred_region
        // Predicated region
        $region21: #{reverse} parent=8 // pred_check
          _
        $region22: #{reverse} parent=8 // pred_check_branch
          %21 = sbr.rel (0) target = $region24
        $region23: #{reverse} parent=8 // pred_region
          loop: start=0, step=1, limit=1
          $region25: #{reverse} parent=23 // loop_pre_header
            _
          $region26: #{reverse} parent=23 // loop_header
            %s23 = sphi 0, %s27
            %p24 = scmp.ge.s32.totalorder %s23, 1
            %s28 = sphi %s0, %s0
            %s29 = sphi %s2, %s2
          $region27: #{reverse} parent=23 // loop_header_branch
            %26 = sbr.rel (%p24) target = $region31
          $region28: #{reverse} parent=23 // loop_body
            %v30 = vld [vmem:[%s28] sm:$0xff]
            %31 = vst [vmem:[%s29] sm:$0xff] %v30
          $region29: #{reverse} parent=23 // loop_footer
            %s27 = sadd.s32 1, %s23
          $region30: #{reverse} parent=23 // loop_footer_branch
            %22 = sbr.rel target = $region26
          $region31: #{reverse} parent=23 // loop_exit
            _
        $region24: #{reverse} parent=8 // pred_fallthru
          _
        // Predicated region
        $region32: #{reverse} parent=8 // pred_check
          _
        $region33: #{reverse} parent=8 // pred_check_branch
          %33 = sbr.rel target = $region35
        $region34: #{reverse} parent=8 // pred_region
          _
        $region35: #{reverse} parent=8 // pred_fallthru
          _
      $region9: #{reverse} parent=4 // pred_fallthru
        _
      // Predicated region
      $region10: #{reverse} parent=4 // pred_check
        _
      $region11: #{reverse} parent=4 // pred_check_branch
        %8 = sbr.rel target = $region13
      $region12: #{reverse} parent=4 // pred_region
        loop: start=0, step=1, limit=1
        $region14: #{reverse} parent=12 // loop_pre_header
          _
        $region15: #{reverse} parent=12 // loop_header
          %s11 = sphi 0, %s15
          %p12 = scmp.ge.s32.totalorder %s11, 1
          %s16 = sphi %s0, %s0
          %s17 = sphi %s2, %s2
        $region16: #{reverse} parent=12 // loop_header_branch
          %14 = sbr.rel (%p12) target = $region20
        $region17: #{reverse} parent=12 // loop_body
          %v18 = vld [vmem:[%s16] sm:$0xff]
          %19 = vst [vmem:[%s17] sm:$0xff] %v18
        $region18: #{reverse} parent=12 // loop_footer
          %s15 = sadd.s32 1, %s11
        $region19: #{reverse} parent=12 // loop_footer_branch
          %10 = sbr.rel target = $region15
        $region20: #{reverse} parent=12 // loop_exit
          _
      $region13: #{reverse} parent=4 // pred_fallthru
        _
    $region5: #{reverse} parent=1 // pred_fallthru
      _
    %34 = vnop
    %s35 = scalar_lea.vmem [#allocation0], 7
    %v36 = vld [vmem:[%s35] ss:$-1 sm:$0xff]
    %v37 = vrot.slane %v36, 2
    %38 = vst [vmem:[#allocation1] sm:$0xff] %v37
    %s39 = scalar_lea.vmem [#allocation0], 8
    %s40 = scalar_lea.vmem %s39, 7 [#allocation0]
    %v41 = vld [vmem:[%s40] ss:$-1 sm:$0xff]
    %v42 = vrot.slane %v41, 2
    %v43 = vlaneseq
    %v44 = vshrl.u32 %v43, 7
    %vm45 = vcmp.lt.s32.totalorder %v44, 6
    %46 = vst.msk [vmem:[#allocation1] sm:$0xff] %vm45, %v42
    // Predicated region
    $region36: #{reverse} parent=1 // pred_check
      _
    $region37: #{reverse} parent=1 // pred_check_branch
      %48 = sbr.rel (0) target = $region39
    $region38: #{reverse} parent=1 // pred_region
      // Predicated region
      $region40: #{reverse} parent=38 // pred_check
        _
      $region41: #{reverse} parent=38 // pred_check_branch
        %50 = sbr.rel (0) target = $region43
      $region42: #{reverse} parent=38 // pred_region
        // Predicated region
        $region55: #{reverse} parent=42 // pred_check
          _
        $region56: #{reverse} parent=42 // pred_check_branch
          %65 = sbr.rel (0) target = $region58
        $region57: #{reverse} parent=42 // pred_region
          loop: start=0, step=1, limit=1
          $region59: #{reverse} parent=57 // loop_pre_header
            _
          $region60: #{reverse} parent=57 // loop_header
            %s67 = sphi 0, %s71
            %p68 = scmp.ge.s32.totalorder %s67, 1
            %s72 = sphi [#allocation1], [#allocation1]
            %s73 = sphi %s1, %s1
          $region61: #{reverse} parent=57 // loop_header_branch
            %70 = sbr.rel (%p68) target = $region65
          $region62: #{reverse} parent=57 // loop_body
            %v74 = vld [vmem:[%s72] sm:$0xff]
            %75 = vst [vmem:[%s73] sm:$0xff] %v74
          $region63: #{reverse} parent=57 // loop_footer
            %s71 = sadd.s32 1, %s67
          $region64: #{reverse} parent=57 // loop_footer_branch
            %66 = sbr.rel target = $region60
          $region65: #{reverse} parent=57 // loop_exit
            _
        $region58: #{reverse} parent=42 // pred_fallthru
          _
        // Predicated region
        $region66: #{reverse} parent=42 // pred_check
          _
        $region67: #{reverse} parent=42 // pred_check_branch
          %77 = sbr.rel target = $region69
        $region68: #{reverse} parent=42 // pred_region
          _
        $region69: #{reverse} parent=42 // pred_fallthru
          _
      $region43: #{reverse} parent=38 // pred_fallthru
        _
      // Predicated region
      $region44: #{reverse} parent=38 // pred_check
        _
      $region45: #{reverse} parent=38 // pred_check_branch
        %52 = sbr.rel target = $region47
      $region46: #{reverse} parent=38 // pred_region
        loop: start=0, step=1, limit=1
        $region48: #{reverse} parent=46 // loop_pre_header
          _
        $region49: #{reverse} parent=46 // loop_header
          %s55 = sphi 0, %s59
          %p56 = scmp.ge.s32.totalorder %s55, 1
          %s60 = sphi [#allocation1], [#allocation1]
          %s61 = sphi %s1, %s1
        $region50: #{reverse} parent=46 // loop_header_branch
          %58 = sbr.rel (%p56) target = $region54
        $region51: #{reverse} parent=46 // loop_body
          %v62 = vld [vmem:[%s60] sm:$0xff]
          %63 = vst [vmem:[%s61] sm:$0xff] %v62
        $region52: #{reverse} parent=46 // loop_footer
          %s59 = sadd.s32 1, %s55
        $region53: #{reverse} parent=46 // loop_footer_branch
          %54 = sbr.rel target = $region49
        $region54: #{reverse} parent=46 // loop_exit
          _
      $region47: #{reverse} parent=38 // pred_fallthru
        _
    $region39: #{reverse} parent=1 // pred_fallthru
      _
    %78 = vnop

// kernel: combined_model_forward.1
$region0: #{combined_model_forward.1}
  #allocation0 [shape = 'u32[]', space=smem, size = 0x4, offset = 0x4, fixed_abs, tag = 'smem constant byte address 0x4 - core index']
  #allocation1 [shape = 'u32[144,128]{1,0:T(1,128)}', space=vmem, size = 0x12000, scoped, tag = 'internal scratch']
  %s0 = inlined_call_operand.vmem [shape: f32[768,2], index: 0, kind: input, shape index: {}]
  %s1 = inlined_call_operand.vmem [shape: f32[72,128], index: 1, kind: input, shape index: {}]
  %s2 = inlined_call_operand.vmem [shape: f32[768,128], index: 2, kind: output, shape index: {}]
  %s3 = sld [smem:[#allocation0]]
  $region41: #{combined_model_forward.1} parent=0
    _
  %s5 = ssub.s32 1, %s3
  %s6 = scalar_select 0, %s5, %s3
  loop: start=0, step=1, limit=4
  $region2: #{combined_model_forward.1} parent=0 // loop_pre_header
    _
  $region3: #{combined_model_forward.1} parent=0 // loop_header
    %s8 = sphi 0, %s12
    %p9 = scmp.ge.s32.totalorder %s8, 4
    %s18 = sphi 0, %s20
    %s21 = sphi 0, %s18
    %s22 = sphi 0, %s21
    %s38 = sphi 0, %s22
    %s42 = sphi 0, %s42
    %s44 = sphi 0, %s42
    %s45 = sphi 0, %s44
    %s59 = sphi 0, %s45
    %s65 = sphi 0, %s67
    %s68 = sphi 0, %s65
    %s69 = sphi 0, %s68
    %s85 = sphi 0, %s69
  $region4: #{combined_model_forward.1} parent=0 // loop_header_branch
    %11 = sbr.rel (%p9) target = $region8
  $region5: #{combined_model_forward.1} parent=0 // loop_body
    %s13 = ssub.s32 %s8, 1
    %s14 = ssub.s32 %s8, 2
    %s15 = sadd.s32 %s8, 1
    %s16 = ssub.s32 %s8, %s15
    %p17 = scmp.eq.s32.totalorder %s16, 0
    %s19 = sadd.s32 %s18, 1
    %s20 = scalar_select %p17, %s18, %s19
    %p23 = pneg %p17
    %p24 = scmp.eq.s32.totalorder %s8, 1
    %p25 = por %p23, %p24
    %p26 = scmp.ne.s32.totalorder %s18, %s21
    %p27 = scmp.eq.s32.totalorder %s8, 0
    %p28 = por %p26, %p27
    %p29 = scmp.ne.s32.totalorder %s18, %s21
    %p30 = scmp.eq.s32.totalorder %s13, 1
    %p31 = por %p29, %p30
    %p32 = scmp.ne.s32.totalorder %s21, %s22
    %p33 = scmp.eq.s32.totalorder %s13, 0
    %p34 = por %p32, %p33
    %p35 = scmp.ne.s32.totalorder %s21, %s22
    %p36 = scmp.eq.s32.totalorder %s14, 1
    %p37 = por %p35, %p36
    %p39 = scmp.ne.s32.totalorder %s22, %s38
    %p40 = scmp.eq.s32.totalorder %s14, 0
    %p41 = por %p39, %p40
    %s43 = sadd.s32 %s42, 1
    %p46 = scmp.eq.s32.totalorder %s8, 1
    %p47 = scmp.ne.s32.totalorder %s42, %s44
    %p48 = scmp.eq.s32.totalorder %s8, 0
    %p49 = por %p47, %p48
    %p50 = scmp.ne.s32.totalorder %s42, %s44
    %p51 = scmp.eq.s32.totalorder %s13, 1
    %p52 = por %p50, %p51
    %p53 = scmp.ne.s32.totalorder %s44, %s45
    %p54 = scmp.eq.s32.totalorder %s13, 0
    %p55 = por %p53, %p54
    %p56 = scmp.ne.s32.totalorder %s44, %s45
    %p57 = scmp.eq.s32.totalorder %s14, 1
    %p58 = por %p56, %p57
    %p60 = scmp.ne.s32.totalorder %s45, %s59
    %p61 = scmp.eq.s32.totalorder %s14, 0
    %p62 = por %p60, %p61
    %s63 = ssub.s32 %s8, %s15
    %p64 = scmp.eq.s32.totalorder %s63, 0
    %s66 = sadd.s32 %s65, 1
    %s67 = scalar_select %p64, %s65, %s66
    %p70 = pneg %p64
    %p71 = scmp.eq.s32.totalorder %s8, 1
    %p72 = por %p70, %p71
    %p73 = scmp.ne.s32.totalorder %s65, %s68
    %p74 = scmp.eq.s32.totalorder %s8, 0
    %p75 = por %p73, %p74
    %p76 = scmp.ne.s32.totalorder %s65, %s68
    %p77 = scmp.eq.s32.totalorder %s13, 1
    %p78 = por %p76, %p77
    %p79 = scmp.ne.s32.totalorder %s68, %s69
    %p80 = scmp.eq.s32.totalorder %s13, 0
    %p81 = por %p79, %p80
    %p82 = scmp.ne.s32.totalorder %s68, %s69
    %p83 = scmp.eq.s32.totalorder %s14, 1
    %p84 = por %p82, %p83
    %p86 = scmp.ne.s32.totalorder %s69, %s85
    %p87 = scmp.eq.s32.totalorder %s14, 0
    %p88 = por %p86, %p87
    %p89 = scmp.le.s32.totalorder 1, %s8
    %p90 = scmp.lt.s32.totalorder %s8, 3
    %p91 = pnand %p89, %p90
    %p92 = pneg %p91
    // Predicated region
    $region9: #{combined_model_forward.1} parent=5 // pred_check
      _
    $region10: #{combined_model_forward.1} parent=5 // pred_check_branch
      %94 = sbr.rel (%p91) target = $region12
    $region11: #{combined_model_forward.1} parent=5 // pred_region
      %s95 = ssub.s32 %s8, 1
      // Predicated region
      $region13: #{combined_model_forward.1} parent=11 // pred_check
        %p96 = pneg %p55
      $region14: #{combined_model_forward.1} parent=11 // pred_check_branch
        %98 = sbr.rel (%p96) target = $region16
      $region15: #{combined_model_forward.1} parent=11 // pred_region
        _
      $region16: #{combined_model_forward.1} parent=11 // pred_fallthru
        _
    $region12: #{combined_model_forward.1} parent=5 // pred_fallthru
      _
    %p99 = scmp.lt.s32.totalorder %s8, 2
    // Predicated region
    $region17: #{combined_model_forward.1} parent=5 // pred_check
      %p100 = pneg %p99
    $region18: #{combined_model_forward.1} parent=5 // pred_check_branch
      %102 = sbr.rel (%p100) target = $region20
    $region19: #{combined_model_forward.1} parent=5 // pred_region
      // Predicated region
      $region21: #{combined_model_forward.1} parent=19 // pred_check
        %p103 = pneg %p28
      $region22: #{combined_model_forward.1} parent=19 // pred_check_branch
        %105 = sbr.rel (%p103) target = $region24
      $region23: #{combined_model_forward.1} parent=19 // pred_region
        %s106 = smul.u32 48, %s8
        %p107 = scmp.lt.s32.totalorder %s106, 95
        %s108 = scalar_select %p107, %s106, 95
        %s109 = smul.addr %s108, 8
        %s110 = scalar_lea.vmem %s0, %s109
        %s111 = smul.u32 48, %s8
      $region24: #{combined_model_forward.1} parent=19 // pred_fallthru
        _
    $region20: #{combined_model_forward.1} parent=5 // pred_fallthru
      _
    %p112 = scmp.le.s32.totalorder 1, %s8
    %p113 = scmp.lt.s32.totalorder %s8, 3
    %p114 = pnand %p112, %p113
    %p115 = pneg %p114
    // Predicated region
    $region25: #{combined_model_forward.1} parent=5 // pred_check
      _
    $region26: #{combined_model_forward.1} parent=5 // pred_check_branch
      %117 = sbr.rel (%p114) target = $region28
    $region27: #{combined_model_forward.1} parent=5 // pred_region
      %s118 = ssub.s32 %s8, 1
      %s119 = smul.u32 48, %s13
      %p120 = scmp.lt.s32.totalorder %s119, 95
      %s121 = scalar_select %p120, %s119, 95
      %s122 = smul.addr %s121, 8
      %s123 = scalar_lea.vmem %s0, %s122
      %p124 = pneg %p34
      %p125 = pneg %p31
      %p126 = pneg %p55
      %p127 = pneg %p52
      %p128 = pneg %p81
      %p129 = pneg %p78
      %s130 = smul.u32 48, %s13
      %p131 = scmp.lt.s32.totalorder %s130, 95
      %s132 = scalar_select %p131, %s130, 95
      %s133 = smul.addr %s132, 8
      %s134 = scalar_lea.vmem %s2, %s133
      %s135 = smul.u32 48, %s13
      %p136 = scmp.lt.s32.totalorder %s135, 95
      %s137 = scalar_select %p136, %s135, 95
      %s138 = smul.addr %s137, 8
      %s139 = scalar_lea.vmem %s0, %s138
      %s140 = smul.u32 48, %s13
      %s141 = smul.u32 48, %s13
      %p142 = scmp.lt.s32.totalorder %s141, 95
      %s143 = scalar_select %p142, %s141, 95
      %s144 = smul.addr %s143, 8
      %s145 = scalar_lea.vmem %s2, %s144
      %s146 = smul.u32 48, %s13
      %v147 = vld [vmem:[%s139] sm:$0xff]
      %v148 = vld [vmem:[%s139 + $0x8] sm:$0xff]
      %v149 = vld [vmem:[%s139 + $0x10] sm:$0xff]
      %v150 = vld [vmem:[%s139 + $0x18] sm:$0xff]
      %v151 = vld [vmem:[%s139 + $0x20] sm:$0xff]
      %v152 = vld [vmem:[%s139 + $0x28] sm:$0xff]
      %v153 = vld [vmem:[%s139 + $0x30] sm:$0xff]
      %v154 = vld [vmem:[%s139 + $0x38] sm:$0xff]
      %v155 = vld [vmem:[%s139 + $0x40] sm:$0xff]
      %v156 = vld [vmem:[%s139 + $0x48] sm:$0xff]
      %v157 = vld [vmem:[%s139 + $0x50] sm:$0xff]
      %v158 = vld [vmem:[%s139 + $0x58] sm:$0xff]
      %v159 = vld [vmem:[%s139 + $0x60] sm:$0xff]
      %v160 = vld [vmem:[%s139 + $0x68] sm:$0xff]
      %v161 = vld [vmem:[%s139 + $0x70] sm:$0xff]
      %v162 = vld [vmem:[%s139 + $0x78] sm:$0xff]
      %v163 = vld [vmem:[%s139 + $0x80] sm:$0xff]
      %v164 = vld [vmem:[%s139 + $0x88] sm:$0xff]
      %v165 = vld [vmem:[%s139 + $0x90] sm:$0xff]
      %v166 = vld [vmem:[%s139 + $0x98] sm:$0xff]
      %v167 = vld [vmem:[%s139 + $0xa0] sm:$0xff]
      %v168 = vld [vmem:[%s139 + $0xa8] sm:$0xff]
      %v169 = vld [vmem:[%s139 + $0xb0] sm:$0xff]
      %v170 = vld [vmem:[%s139 + $0xb8] sm:$0xff]
      %v171 = vld [vmem:[%s139 + $0xc0] sm:$0xff]
      %v172 = vld [vmem:[%s139 + $0xc8] sm:$0xff]
      %v173 = vld [vmem:[%s139 + $0xd0] sm:$0xff]
      %v174 = vld [vmem:[%s139 + $0xd8] sm:$0xff]
      %v175 = vld [vmem:[%s139 + $0xe0] sm:$0xff]
      %v176 = vld [vmem:[%s139 + $0xe8] sm:$0xff]
      %v177 = vld [vmem:[%s139 + $0xf0] sm:$0xff]
      %v178 = vld [vmem:[%s139 + $0xf8] sm:$0xff]
      %v179 = vld [vmem:[%s139 + $0x100] sm:$0xff]
      %v180 = vld [vmem:[%s139 + $0x108] sm:$0xff]
      %v181 = vld [vmem:[%s139 + $0x110] sm:$0xff]
      %v182 = vld [vmem:[%s139 + $0x118] sm:$0xff]
      %v183 = vld [vmem:[%s139 + $0x120] sm:$0xff]
      %v184 = vld [vmem:[%s139 + $0x128] sm:$0xff]
      %v185 = vld [vmem:[%s139 + $0x130] sm:$0xff]
      %v186 = vld [vmem:[%s139 + $0x138] sm:$0xff]
      %v187 = vld [vmem:[%s139 + $0x140] sm:$0xff]
      %v188 = vld [vmem:[%s139 + $0x148] sm:$0xff]
      %v189 = vld [vmem:[%s139 + $0x150] sm:$0xff]
      %v190 = vld [vmem:[%s139 + $0x158] sm:$0xff]
      %v191 = vld [vmem:[%s139 + $0x160] sm:$0xff]
      %v192 = vld [vmem:[%s139 + $0x168] sm:$0xff]
      %v193 = vld [vmem:[%s139 + $0x170] sm:$0xff]
      %v194 = vld [vmem:[%s139 + $0x178] sm:$0xff]
      %v195 = vld [vmem:[%s1] sm:$0x1]
      %v196 = vld [vmem:[%s1 + $0x1] sm:$0x1]
      %v197 = vld [vmem:[%s1 + $0x2] sm:$0x1]
      %v198 = vld [vmem:[%s1 + $0x3] sm:$0x1]
      %v199 = vld [vmem:[%s1 + $0x8] sm:$0xff]
      %v200 = vld [vmem:[%s1 + $0x10] sm:$0xff]
      %v201 = vld [vmem:[%s1 + $0x18] sm:$0xff]
      %v202 = vld [vmem:[%s1 + $0x20] sm:$0xff]
      %v203 = vld [vmem:[%s1 + $0x28] sm:$0xff]
      %v204 = vld [vmem:[%s1 + $0x30] sm:$0xff]
      %v205 = vld [vmem:[%s1 + $0x38] sm:$0xff]
      %v206 = vld [vmem:[%s1 + $0x40] sm:$0xff]
      %208 = vset.pattern.permute.xlu0 0
      %209 = vperm.xlu0 %208, %v147
      %v210 = vpop.permute.xlu0 %209
      %213 = vset.pattern.permute.xlu0 0
      %214 = vperm.xlu0 %213, %v148
      %v215 = vpop.permute.xlu0 %214
      %218 = vset.pattern.permute.xlu0 0
      %219 = vperm.xlu0 %218, %v149
      %v220 = vpop.permute.xlu0 %219
      %223 = vset.pattern.permute.xlu0 0
      %224 = vperm.xlu0 %223, %v150
      %v225 = vpop.permute.xlu0 %224
      %228 = vset.pattern.permute.xlu0 0
      %229 = vperm.xlu0 %228, %v151
      %v230 = vpop.permute.xlu0 %229
      %233 = vset.pattern.permute.xlu0 0
      %234 = vperm.xlu0 %233, %v152
      %v235 = vpop.permute.xlu0 %234
      %238 = vset.pattern.permute.xlu0 0
      %239 = vperm.xlu0 %238, %v153
      %v240 = vpop.permute.xlu0 %239
      %243 = vset.pattern.permute.xlu0 0
      %244 = vperm.xlu0 %243, %v154
      %v245 = vpop.permute.xlu0 %244
      %248 = vset.pattern.permute.xlu0 0
      %249 = vperm.xlu0 %248, %v155
      %v250 = vpop.permute.xlu0 %249
      %253 = vset.pattern.permute.xlu0 0
      %254 = vperm.xlu0 %253, %v156
      %v255 = vpop.permute.xlu0 %254
      %258 = vset.pattern.permute.xlu0 0
      %259 = vperm.xlu0 %258, %v157
      %v260 = vpop.permute.xlu0 %259
      %263 = vset.pattern.permute.xlu0 0
      %264 = vperm.xlu0 %263, %v158
      %v265 = vpop.permute.xlu0 %264
      %268 = vset.pattern.permute.xlu0 0
      %269 = vperm.xlu0 %268, %v159
      %v270 = vpop.permute.xlu0 %269
      %273 = vset.pattern.permute.xlu0 0
      %274 = vperm.xlu0 %273, %v160
      %v275 = vpop.permute.xlu0 %274
      %278 = vset.pattern.permute.xlu0 0
      %279 = vperm.xlu0 %278, %v161
      %v280 = vpop.permute.xlu0 %279
      %283 = vset.pattern.permute.xlu0 0
      %284 = vperm.xlu0 %283, %v162
      %v285 = vpop.permute.xlu0 %284
      %288 = vset.pattern.permute.xlu0 0
      %289 = vperm.xlu0 %288, %v163
      %v290 = vpop.permute.xlu0 %289
      %293 = vset.pattern.permute.xlu0 0
      %294 = vperm.xlu0 %293, %v164
      %v295 = vpop.permute.xlu0 %294
      %298 = vset.pattern.permute.xlu0 0
      %299 = vperm.xlu0 %298, %v165
      %v300 = vpop.permute.xlu0 %299
      %303 = vset.pattern.permute.xlu0 0
      %304 = vperm.xlu0 %303, %v166
      %v305 = vpop.permute.xlu0 %304
      %308 = vset.pattern.permute.xlu0 0
      %309 = vperm.xlu0 %308, %v167
      %v310 = vpop.permute.xlu0 %309
      %313 = vset.pattern.permute.xlu0 0
      %314 = vperm.xlu0 %313, %v168
      %v315 = vpop.permute.xlu0 %314
      %318 = vset.pattern.permute.xlu0 0
      %319 = vperm.xlu0 %318, %v169
      %v320 = vpop.permute.xlu0 %319
      %323 = vset.pattern.permute.xlu0 0
      %324 = vperm.xlu0 %323, %v170
      %v325 = vpop.permute.xlu0 %324
      %328 = vset.pattern.permute.xlu0 0
      %329 = vperm.xlu0 %328, %v171
      %v330 = vpop.permute.xlu0 %329
      %333 = vset.pattern.permute.xlu0 0
      %334 = vperm.xlu0 %333, %v172
      %v335 = vpop.permute.xlu0 %334
      %338 = vset.pattern.permute.xlu0 0
      %339 = vperm.xlu0 %338, %v173
      %v340 = vpop.permute.xlu0 %339
      %343 = vset.pattern.permute.xlu0 0
      %344 = vperm.xlu0 %343, %v174
      %v345 = vpop.permute.xlu0 %344
      %348 = vset.pattern.permute.xlu0 0
      %349 = vperm.xlu0 %348, %v175
      %v350 = vpop.permute.xlu0 %349
      %353 = vset.pattern.permute.xlu0 0
      %354 = vperm.xlu0 %353, %v176
      %v355 = vpop.permute.xlu0 %354
      %358 = vset.pattern.permute.xlu0 0
      %359 = vperm.xlu0 %358, %v177
      %v360 = vpop.permute.xlu0 %359
      %363 = vset.pattern.permute.xlu0 0
      %364 = vperm.xlu0 %363, %v178
      %v365 = vpop.permute.xlu0 %364
      %368 = vset.pattern.permute.xlu0 0
      %369 = vperm.xlu0 %368, %v179
      %v370 = vpop.permute.xlu0 %369
      %373 = vset.pattern.permute.xlu0 0
      %374 = vperm.xlu0 %373, %v180
      %v375 = vpop.permute.xlu0 %374
      %378 = vset.pattern.permute.xlu0 0
      %379 = vperm.xlu0 %378, %v181
      %v380 = vpop.permute.xlu0 %379
      %383 = vset.pattern.permute.xlu0 0
      %384 = vperm.xlu0 %383, %v182
      %v385 = vpop.permute.xlu0 %384
      %388 = vset.pattern.permute.xlu0 0
      %389 = vperm.xlu0 %388, %v183
      %v390 = vpop.permute.xlu0 %389
      %393 = vset.pattern.permute.xlu0 0
      %394 = vperm.xlu0 %393, %v184
      %v395 = vpop.permute.xlu0 %394
      %398 = vset.pattern.permute.xlu0 0
      %399 = vperm.xlu0 %398, %v185
      %v400 = vpop.permute.xlu0 %399
      %403 = vset.pattern.permute.xlu0 0
      %404 = vperm.xlu0 %403, %v186
      %v405 = vpop.permute.xlu0 %404
      %408 = vset.pattern.permute.xlu0 0
      %409 = vperm.xlu0 %408, %v187
      %v410 = vpop.permute.xlu0 %409
      %413 = vset.pattern.permute.xlu0 0
      %414 = vperm.xlu0 %413, %v188
      %v415 = vpop.permute.xlu0 %414
      %418 = vset.pattern.permute.xlu0 0
      %419 = vperm.xlu0 %418, %v189
      %v420 = vpop.permute.xlu0 %419
      %423 = vset.pattern.permute.xlu0 0
      %424 = vperm.xlu0 %423, %v190
      %v425 = vpop.permute.xlu0 %424
      %428 = vset.pattern.permute.xlu0 0
      %429 = vperm.xlu0 %428, %v191
      %v430 = vpop.permute.xlu0 %429
      %433 = vset.pattern.permute.xlu0 0
      %434 = vperm.xlu0 %433, %v192
      %v435 = vpop.permute.xlu0 %434
      %438 = vset.pattern.permute.xlu0 0
      %439 = vperm.xlu0 %438, %v193
      %v440 = vpop.permute.xlu0 %439
      %443 = vset.pattern.permute.xlu0 0
      %444 = vperm.xlu0 %443, %v194
      %v445 = vpop.permute.xlu0 %444
      %v447 = vlaneseq
      %v448 = vshrl.u32 %v447, 7
      %v449 = vsub.s32 0, %v448
      %v450 = vrot.slane %v195, %v449
      %v451 = vmul.f32 %v210, %v450
      %v452 = vmul.f32 %v215, %v450
      %v453 = vmul.f32 %v220, %v450
      %v454 = vmul.f32 %v225, %v450
      %v455 = vmul.f32 %v230, %v450
      %v456 = vmul.f32 %v235, %v450
      %v457 = vmul.f32 %v240, %v450
      %v458 = vmul.f32 %v245, %v450
      %v459 = vmul.f32 %v250, %v450
      %v460 = vmul.f32 %v255, %v450
      %v461 = vmul.f32 %v260, %v450
      %v462 = vmul.f32 %v265, %v450
      %v463 = vmul.f32 %v270, %v450
      %v464 = vmul.f32 %v275, %v450
      %v465 = vmul.f32 %v280, %v450
      %v466 = vmul.f32 %v285, %v450
      %v467 = vmul.f32 %v290, %v450
      %v468 = vmul.f32 %v295, %v450
      %v469 = vmul.f32 %v300, %v450
      %v470 = vmul.f32 %v305, %v450
      %v471 = vmul.f32 %v310, %v450
      %v472 = vmul.f32 %v315, %v450
      %v473 = vmul.f32 %v320, %v450
      %v474 = vmul.f32 %v325, %v450
      %v475 = vmul.f32 %v330, %v450
      %v476 = vmul.f32 %v335, %v450
      %v477 = vmul.f32 %v340, %v450
      %v478 = vmul.f32 %v345, %v450
      %v479 = vmul.f32 %v350, %v450
      %v480 = vmul.f32 %v355, %v450
      %v481 = vmul.f32 %v360, %v450
      %v482 = vmul.f32 %v365, %v450
      %v483 = vmul.f32 %v370, %v450
      %v484 = vmul.f32 %v375, %v450
      %v485 = vmul.f32 %v380, %v450
      %v486 = vmul.f32 %v385, %v450
      %v487 = vmul.f32 %v390, %v450
      %v488 = vmul.f32 %v395, %v450
      %v489 = vmul.f32 %v400, %v450
      %v490 = vmul.f32 %v405, %v450
      %v491 = vmul.f32 %v410, %v450
      %v492 = vmul.f32 %v415, %v450
      %v493 = vmul.f32 %v420, %v450
      %v494 = vmul.f32 %v425, %v450
      %v495 = vmul.f32 %v430, %v450
      %v496 = vmul.f32 %v435, %v450
      %v497 = vmul.f32 %v440, %v450
      %v498 = vmul.f32 %v445, %v450
      %499 = vset.pattern.permute.xlu0 1
      %500 = vperm.xlu0 %499, %v147
      %v501 = vpop.permute.xlu0 %500
      %503 = vset.pattern.permute.xlu0 1
      %504 = vperm.xlu0 %503, %v148
      %v505 = vpop.permute.xlu0 %504
      %507 = vset.pattern.permute.xlu0 1
      %508 = vperm.xlu0 %507, %v149
      %v509 = vpop.permute.xlu0 %508
      %511 = vset.pattern.permute.xlu0 1
      %512 = vperm.xlu0 %511, %v150
      %v513 = vpop.permute.xlu0 %512
      %515 = vset.pattern.permute.xlu0 1
      %516 = vperm.xlu0 %515, %v151
      %v517 = vpop.permute.xlu0 %516
      %519 = vset.pattern.permute.xlu0 1
      %520 = vperm.xlu0 %519, %v152
      %v521 = vpop.permute.xlu0 %520
      %523 = vset.pattern.permute.xlu0 1
      %524 = vperm.xlu0 %523, %v153
      %v525 = vpop.permute.xlu0 %524
      %527 = vset.pattern.permute.xlu0 1
      %528 = vperm.xlu0 %527, %v154
      %v529 = vpop.permute.xlu0 %528
      %531 = vset.pattern.permute.xlu0 1
      %532 = vperm.xlu0 %531, %v155
      %v533 = vpop.permute.xlu0 %532
      %535 = vset.pattern.permute.xlu0 1
      %536 = vperm.xlu0 %535, %v156
      %v537 = vpop.permute.xlu0 %536
      %539 = vset.pattern.permute.xlu0 1
      %540 = vperm.xlu0 %539, %v157
      %v541 = vpop.permute.xlu0 %540
      %543 = vset.pattern.permute.xlu0 1
      %544 = vperm.xlu0 %543, %v158
      %v545 = vpop.permute.xlu0 %544
      %547 = vset.pattern.permute.xlu0 1
      %548 = vperm.xlu0 %547, %v159
      %v549 = vpop.permute.xlu0 %548
      %551 = vset.pattern.permute.xlu0 1
      %552 = vperm.xlu0 %551, %v160
      %v553 = vpop.permute.xlu0 %552
      %555 = vset.pattern.permute.xlu0 1
      %556 = vperm.xlu0 %555, %v161
      %v557 = vpop.permute.xlu0 %556
      %559 = vset.pattern.permute.xlu0 1
      %560 = vperm.xlu0 %559, %v162
      %v561 = vpop.permute.xlu0 %560
      %563 = vset.pattern.permute.xlu0 1
      %564 = vperm.xlu0 %563, %v163
      %v565 = vpop.permute.xlu0 %564
      %567 = vset.pattern.permute.xlu0 1
      %568 = vperm.xlu0 %567, %v164
      %v569 = vpop.permute.xlu0 %568
      %571 = vset.pattern.permute.xlu0 1
      %572 = vperm.xlu0 %571, %v165
      %v573 = vpop.permute.xlu0 %572
      %575 = vset.pattern.permute.xlu0 1
      %576 = vperm.xlu0 %575, %v166
      %v577 = vpop.permute.xlu0 %576
      %579 = vset.pattern.permute.xlu0 1
      %580 = vperm.xlu0 %579, %v167
      %v581 = vpop.permute.xlu0 %580
      %583 = vset.pattern.permute.xlu0 1
      %584 = vperm.xlu0 %583, %v168
      %v585 = vpop.permute.xlu0 %584
      %587 = vset.pattern.permute.xlu0 1
      %588 = vperm.xlu0 %587, %v169
      %v589 = vpop.permute.xlu0 %588
      %591 = vset.pattern.permute.xlu0 1
      %592 = vperm.xlu0 %591, %v170
      %v593 = vpop.permute.xlu0 %592
      %595 = vset.pattern.permute.xlu0 1
      %596 = vperm.xlu0 %595, %v171
      %v597 = vpop.permute.xlu0 %596
      %599 = vset.pattern.permute.xlu0 1
      %600 = vperm.xlu0 %599, %v172
      %v601 = vpop.permute.xlu0 %600
      %603 = vset.pattern.permute.xlu0 1
      %604 = vperm.xlu0 %603, %v173
      %v605 = vpop.permute.xlu0 %604
      %607 = vset.pattern.permute.xlu0 1
      %608 = vperm.xlu0 %607, %v174
      %v609 = vpop.permute.xlu0 %608
      %611 = vset.pattern.permute.xlu0 1
      %612 = vperm.xlu0 %611, %v175
      %v613 = vpop.permute.xlu0 %612
      %615 = vset.pattern.permute.xlu0 1
      %616 = vperm.xlu0 %615, %v176
      %v617 = vpop.permute.xlu0 %616
      %619 = vset.pattern.permute.xlu0 1
      %620 = vperm.xlu0 %619, %v177
      %v621 = vpop.permute.xlu0 %620
      %623 = vset.pattern.permute.xlu0 1
      %624 = vperm.xlu0 %623, %v178
      %v625 = vpop.permute.xlu0 %624
      %627 = vset.pattern.permute.xlu0 1
      %628 = vperm.xlu0 %627, %v179
      %v629 = vpop.permute.xlu0 %628
      %631 = vset.pattern.permute.xlu0 1
      %632 = vperm.xlu0 %631, %v180
      %v633 = vpop.permute.xlu0 %632
      %635 = vset.pattern.permute.xlu0 1
      %636 = vperm.xlu0 %635, %v181
      %v637 = vpop.permute.xlu0 %636
      %639 = vset.pattern.permute.xlu0 1
      %640 = vperm.xlu0 %639, %v182
      %v641 = vpop.permute.xlu0 %640
      %643 = vset.pattern.permute.xlu0 1
      %644 = vperm.xlu0 %643, %v183
      %v645 = vpop.permute.xlu0 %644
      %647 = vset.pattern.permute.xlu0 1
      %648 = vperm.xlu0 %647, %v184
      %v649 = vpop.permute.xlu0 %648
      %651 = vset.pattern.permute.xlu0 1
      %652 = vperm.xlu0 %651, %v185
      %v653 = vpop.permute.xlu0 %652
      %655 = vset.pattern.permute.xlu0 1
      %656 = vperm.xlu0 %655, %v186
      %v657 = vpop.permute.xlu0 %656
      %659 = vset.pattern.permute.xlu0 1
      %660 = vperm.xlu0 %659, %v187
      %v661 = vpop.permute.xlu0 %660
      %663 = vset.pattern.permute.xlu0 1
      %664 = vperm.xlu0 %663, %v188
      %v665 = vpop.permute.xlu0 %664
      %667 = vset.pattern.permute.xlu0 1
      %668 = vperm.xlu0 %667, %v189
      %v669 = vpop.permute.xlu0 %668
      %671 = vset.pattern.permute.xlu0 1
      %672 = vperm.xlu0 %671, %v190
      %v673 = vpop.permute.xlu0 %672
      %675 = vset.pattern.permute.xlu0 1
      %676 = vperm.xlu0 %675, %v191
      %v677 = vpop.permute.xlu0 %676
      %679 = vset.pattern.permute.xlu0 1
      %680 = vperm.xlu0 %679, %v192
      %v681 = vpop.permute.xlu0 %680
      %683 = vset.pattern.permute.xlu0 1
      %684 = vperm.xlu0 %683, %v193
      %v685 = vpop.permute.xlu0 %684
      %687 = vset.pattern.permute.xlu0 1
      %688 = vperm.xlu0 %687, %v194
      %v689 = vpop.permute.xlu0 %688
      %v691 = vlaneseq
      %v692 = vshrl.u32 %v691, 7
      %v693 = vsub.s32 0, %v692
      %v694 = vrot.slane %v196, %v693
      %v695 = vmul.f32 %v501, %v694
      %v696 = vmul.f32 %v505, %v694
      %v697 = vmul.f32 %v509, %v694
      %v698 = vmul.f32 %v513, %v694
      %v699 = vmul.f32 %v517, %v694
      %v700 = vmul.f32 %v521, %v694
      %v701 = vmul.f32 %v525, %v694
      %v702 = vmul.f32 %v529, %v694
      %v703 = vmul.f32 %v533, %v694
      %v704 = vmul.f32 %v537, %v694
      %v705 = vmul.f32 %v541, %v694
      %v706 = vmul.f32 %v545, %v694
      %v707 = vmul.f32 %v549, %v694
      %v708 = vmul.f32 %v553, %v694
      %v709 = vmul.f32 %v557, %v694
      %v710 = vmul.f32 %v561, %v694
      %v711 = vmul.f32 %v565, %v694
      %v712 = vmul.f32 %v569, %v694
      %v713 = vmul.f32 %v573, %v694
      %v714 = vmul.f32 %v577, %v694
      %v715 = vmul.f32 %v581, %v694
      %v716 = vmul.f32 %v585, %v694
      %v717 = vmul.f32 %v589, %v694
      %v718 = vmul.f32 %v593, %v694
      %v719 = vmul.f32 %v597, %v694
      %v720 = vmul.f32 %v601, %v694
      %v721 = vmul.f32 %v605, %v694
      %v722 = vmul.f32 %v609, %v694
      %v723 = vmul.f32 %v613, %v694
      %v724 = vmul.f32 %v617, %v694
      %v725 = vmul.f32 %v621, %v694
      %v726 = vmul.f32 %v625, %v694
      %v727 = vmul.f32 %v629, %v694
      %v728 = vmul.f32 %v633, %v694
      %v729 = vmul.f32 %v637, %v694
      %v730 = vmul.f32 %v641, %v694
      %v731 = vmul.f32 %v645, %v694
      %v732 = vmul.f32 %v649, %v694
      %v733 = vmul.f32 %v653, %v694
      %v734 = vmul.f32 %v657, %v694
      %v735 = vmul.f32 %v661, %v694
      %v736 = vmul.f32 %v665, %v694
      %v737 = vmul.f32 %v669, %v694
      %v738 = vmul.f32 %v673, %v694
      %v739 = vmul.f32 %v677, %v694
      %v740 = vmul.f32 %v681, %v694
      %v741 = vmul.f32 %v685, %v694
      %v742 = vmul.f32 %v689, %v694
      %v743 = vadd.f32 %v451, %v695
      %v744 = vadd.f32 %v452, %v696
      %v745 = vadd.f32 %v453, %v697
      %v746 = vadd.f32 %v454, %v698
      %v747 = vadd.f32 %v455, %v699
      %v748 = vadd.f32 %v456, %v700
      %v749 = vadd.f32 %v457, %v701
      %v750 = vadd.f32 %v458, %v702
      %v751 = vadd.f32 %v459, %v703
      %v752 = vadd.f32 %v460, %v704
      %v753 = vadd.f32 %v461, %v705
      %v754 = vadd.f32 %v462, %v706
      %v755 = vadd.f32 %v463, %v707
      %v756 = vadd.f32 %v464, %v708
      %v757 = vadd.f32 %v465, %v709
      %v758 = vadd.f32 %v466, %v710
      %v759 = vadd.f32 %v467, %v711
      %v760 = vadd.f32 %v468, %v712
      %v761 = vadd.f32 %v469, %v713
      %v762 = vadd.f32 %v470, %v714
      %v763 = vadd.f32 %v471, %v715
      %v764 = vadd.f32 %v472, %v716
      %v765 = vadd.f32 %v473, %v717
      %v766 = vadd.f32 %v474, %v718
      %v767 = vadd.f32 %v475, %v719
      %v768 = vadd.f32 %v476, %v720
      %v769 = vadd.f32 %v477, %v721
      %v770 = vadd.f32 %v478, %v722
      %v771 = vadd.f32 %v479, %v723
      %v772 = vadd.f32 %v480, %v724
      %v773 = vadd.f32 %v481, %v725
      %v774 = vadd.f32 %v482, %v726
      %v775 = vadd.f32 %v483, %v727
      %v776 = vadd.f32 %v484, %v728
      %v777 = vadd.f32 %v485, %v729
      %v778 = vadd.f32 %v486, %v730
      %v779 = vadd.f32 %v487, %v731
      %v780 = vadd.f32 %v488, %v732
      %v781 = vadd.f32 %v489, %v733
      %v782 = vadd.f32 %v490, %v734
      %v783 = vadd.f32 %v491, %v735
      %v784 = vadd.f32 %v492, %v736
      %v785 = vadd.f32 %v493, %v737
      %v786 = vadd.f32 %v494, %v738
      %v787 = vadd.f32 %v495, %v739
      %v788 = vadd.f32 %v496, %v740
      %v789 = vadd.f32 %v497, %v741
      %v790 = vadd.f32 %v498, %v742
      %v791 = vlaneseq
      %v792 = vshrl.u32 %v791, 7
      %v793 = vsub.s32 0, %v792
      %v794 = vrot.slane %v197, %v793
      %v795 = vadd.f32 %v743, %v794
      %v796 = vadd.f32 %v744, %v794
      %v797 = vadd.f32 %v745, %v794
      %v798 = vadd.f32 %v746, %v794
      %v799 = vadd.f32 %v747, %v794
      %v800 = vadd.f32 %v748, %v794
      %v801 = vadd.f32 %v749, %v794
      %v802 = vadd.f32 %v750, %v794
      %v803 = vadd.f32 %v751, %v794
      %v804 = vadd.f32 %v752, %v794
      %v805 = vadd.f32 %v753, %v794
      %v806 = vadd.f32 %v754, %v794
      %v807 = vadd.f32 %v755, %v794
      %v808 = vadd.f32 %v756, %v794
      %v809 = vadd.f32 %v757, %v794
      %v810 = vadd.f32 %v758, %v794
      %v811 = vadd.f32 %v759, %v794
      %v812 = vadd.f32 %v760, %v794
      %v813 = vadd.f32 %v761, %v794
      %v814 = vadd.f32 %v762, %v794
      %v815 = vadd.f32 %v763, %v794
      %v816 = vadd.f32 %v764, %v794
      %v817 = vadd.f32 %v765, %v794
      %v818 = vadd.f32 %v766, %v794
      %v819 = vadd.f32 %v767, %v794
      %v820 = vadd.f32 %v768, %v794
      %v821 = vadd.f32 %v769, %v794
      %v822 = vadd.f32 %v770, %v794
      %v823 = vadd.f32 %v771, %v794
      %v824 = vadd.f32 %v772, %v794
      %v825 = vadd.f32 %v773, %v794
      %v826 = vadd.f32 %v774, %v794
      %v827 = vadd.f32 %v775, %v794
      %v828 = vadd.f32 %v776, %v794
      %v829 = vadd.f32 %v777, %v794
      %v830 = vadd.f32 %v778, %v794
      %v831 = vadd.f32 %v779, %v794
      %v832 = vadd.f32 %v780, %v794
      %v833 = vadd.f32 %v781, %v794
      %v834 = vadd.f32 %v782, %v794
      %v835 = vadd.f32 %v783, %v794
      %v836 = vadd.f32 %v784, %v794
      %v837 = vadd.f32 %v785, %v794
      %v838 = vadd.f32 %v786, %v794
      %v839 = vadd.f32 %v787, %v794
      %v840 = vadd.f32 %v788, %v794
      %v841 = vadd.f32 %v789, %v794
      %v842 = vadd.f32 %v790, %v794
      %v843 = vmax.f32 %v795, 0.0
      %v844 = vmax.f32 %v796, 0.0
      %v845 = vmax.f32 %v797, 0.0
      %v846 = vmax.f32 %v798, 0.0
      %v847 = vmax.f32 %v799, 0.0
      %v848 = vmax.f32 %v800, 0.0
      %v849 = vmax.f32 %v801, 0.0
      %v850 = vmax.f32 %v802, 0.0
      %v851 = vmax.f32 %v803, 0.0
      %v852 = vmax.f32 %v804, 0.0
      %v853 = vmax.f32 %v805, 0.0
      %v854 = vmax.f32 %v806, 0.0
      %v855 = vmax.f32 %v807, 0.0
      %v856 = vmax.f32 %v808, 0.0
      %v857 = vmax.f32 %v809, 0.0
      %v858 = vmax.f32 %v810, 0.0
      %v859 = vmax.f32 %v811, 0.0
      %v860 = vmax.f32 %v812, 0.0
      %v861 = vmax.f32 %v813, 0.0
      %v862 = vmax.f32 %v814, 0.0
      %v863 = vmax.f32 %v815, 0.0
      %v864 = vmax.f32 %v816, 0.0
      %v865 = vmax.f32 %v817, 0.0
      %v866 = vmax.f32 %v818, 0.0
      %v867 = vmax.f32 %v819, 0.0
      %v868 = vmax.f32 %v820, 0.0
      %v869 = vmax.f32 %v821, 0.0
      %v870 = vmax.f32 %v822, 0.0
      %v871 = vmax.f32 %v823, 0.0
      %v872 = vmax.f32 %v824, 0.0
      %v873 = vmax.f32 %v825, 0.0
      %v874 = vmax.f32 %v826, 0.0
      %v875 = vmax.f32 %v827, 0.0
      %v876 = vmax.f32 %v828, 0.0
      %v877 = vmax.f32 %v829, 0.0
      %v878 = vmax.f32 %v830, 0.0
      %v879 = vmax.f32 %v831, 0.0
      %v880 = vmax.f32 %v832, 0.0
      %v881 = vmax.f32 %v833, 0.0
      %v882 = vmax.f32 %v834, 0.0
      %v883 = vmax.f32 %v835, 0.0
      %v884 = vmax.f32 %v836, 0.0
      %v885 = vmax.f32 %v837, 0.0
      %v886 = vmax.f32 %v838, 0.0
      %v887 = vmax.f32 %v839, 0.0
      %v888 = vmax.f32 %v840, 0.0
      %v889 = vmax.f32 %v841, 0.0
      %v890 = vmax.f32 %v842, 0.0
      %v891 = vlaneseq
      %v892 = vshrl.u32 %v891, 7
      %v893 = vsub.s32 0, %v892
      %v894 = vrot.slane %v198, %v893
      %vm895 = vcmask 523264
      %v897 = vsel %vm895, %v843, 0
      %v900 = vsel %vm895, %v844, 0
      %v903 = vsel %vm895, %v845, 0
      %v906 = vsel %vm895, %v846, 0
      %v909 = vsel %vm895, %v847, 0
      %v912 = vsel %vm895, %v848, 0
      %v915 = vsel %vm895, %v849, 0
      %v918 = vsel %vm895, %v850, 0
      %v921 = vsel %vm895, %v851, 0
      %v924 = vsel %vm895, %v852, 0
      %v927 = vsel %vm895, %v853, 0
      %v930 = vsel %vm895, %v854, 0
      %v933 = vsel %vm895, %v855, 0
      %v936 = vsel %vm895, %v856, 0
      %v939 = vsel %vm895, %v857, 0
      %v942 = vsel %vm895, %v858, 0
      %v945 = vsel %vm895, %v859, 0
      %v948 = vsel %vm895, %v860, 0
      %v951 = vsel %vm895, %v861, 0
      %v954 = vsel %vm895, %v862, 0
      %v957 = vsel %vm895, %v863, 0
      %v960 = vsel %vm895, %v864, 0
      %v963 = vsel %vm895, %v865, 0
      %v966 = vsel %vm895, %v866, 0
      %v969 = vsel %vm895, %v867, 0
      %v972 = vsel %vm895, %v868, 0
      %v975 = vsel %vm895, %v869, 0
      %v978 = vsel %vm895, %v870, 0
      %v981 = vsel %vm895, %v871, 0
      %v984 = vsel %vm895, %v872, 0
      %v987 = vsel %vm895, %v873, 0
      %v990 = vsel %vm895, %v874, 0
      %v993 = vsel %vm895, %v875, 0
      %v996 = vsel %vm895, %v876, 0
      %v999 = vsel %vm895, %v877, 0
      %v1002 = vsel %vm895, %v878, 0
      %v1005 = vsel %vm895, %v879, 0
      %v1008 = vsel %vm895, %v880, 0
      %v1011 = vsel %vm895, %v881, 0
      %v1014 = vsel %vm895, %v882, 0
      %v1017 = vsel %vm895, %v883, 0
      %v1020 = vsel %vm895, %v884, 0
      %v1023 = vsel %vm895, %v885, 0
      %v1026 = vsel %vm895, %v886, 0
      %v1029 = vsel %vm895, %v887, 0
      %v1032 = vsel %vm895, %v888, 0
      %v1035 = vsel %vm895, %v889, 0
      %v1038 = vsel %vm895, %v890, 0
      %1040 = vmatprep.subr.mxu0 0.0
      %1041 = vmatpush1.msra.mxu0 %v199
      %1042 = vmatprep.subr.mxu0 0.0
      %1043 = vmatpush1.msra.mxu0 %v200
      %1044 = vmatprep.subr.mxu0 0.0
      %1045 = vmatpush1.msra.mxu0 %v201
      %1046 = vmatprep.subr.mxu0 0.0
      %1047 = vmatpush1.msra.mxu0 %v202
      %1048 = vmatprep.subr.mxu0 0.0
      %1049 = vmatpush1.msra.mxu0 %v203
      %1050 = vmatprep.subr.mxu0 0.0
      %1051 = vmatpush1.msra.mxu0 %v204
      %1052 = vmatprep.subr.mxu0 0.0
      %1053 = vmatpush1.msra.mxu0 %v205
      %1054 = vmatprep.subr.mxu0 0.0
      %1055 = vmatpush1.msra.mxu0 %v206
      %1056 = vmatprep.subr.mxu0 0.0
      %1057 = vmatpush1.msra.mxu0 0.0
      %1058 = vmatprep.subr.mxu0 0.0
      %1059 = vmatpush1.msra.mxu0 0.0
      %1060 = vmatprep.subr.mxu0 0.0
      %1061 = vmatpush1.msra.mxu0 0.0
      %1062 = vmatprep.subr.mxu0 0.0
      %1063 = vmatpush1.msra.mxu0 0.0
      %1064 = vmatprep.subr.mxu0 0.0
      %1065 = vmatpush1.msra.mxu0 0.0
      %1066 = vmatprep.subr.mxu0 0.0
      %1067 = vmatpush1.msra.mxu0 0.0
      %1068 = vmatprep.subr.mxu0 0.0
      %1069 = vmatpush1.msra.mxu0 0.0
      %1070 = vmatprep.subr.mxu0 0.0
      %1071 = vmatpush1.msra.mxu0 0.0
      %1072 = vmatprep.subr.mxu0 0.0
      %1073 = vmatpush1.msra.mxu0 0.0
      %1074 = vmatprep.subr.mxu0 0.0
      %1075 = vmatpush1.msra.mxu0 0.0
      %1076 = vmatprep.subr.mxu0 0.0
      %1077 = vmatpush1.msra.mxu0 0.0
      %1078 = vmatprep.subr.mxu0 0.0
      %1079 = vmatpush1.msra.mxu0 0.0
      %1080 = vmatprep.subr.mxu0 0.0
      %1081 = vmatpush1.msra.mxu0 0.0
      %1082 = vmatprep.subr.mxu0 0.0
      %1083 = vmatpush1.msra.mxu0 0.0
      %1084 = vmatprep.subr.mxu0 0.0
      %1085 = vmatpush1.msra.mxu0 0.0
      %1086 = vmatprep.subr.mxu0 0.0
      %1087 = vmatpush1.msra.mxu0 0.0
      %1088 = vmatprep.subr.mxu0 0.0
      %1089 = vmatpush1.msra.mxu0 0.0
      %1090 = vmatprep.subr.mxu0 0.0
      %1091 = vmatpush1.msra.mxu0 0.0
      %1092 = vmatprep.subr.mxu0 0.0
      %1093 = vmatpush1.msra.mxu0 0.0
      %1094 = vmatprep.subr.mxu0 0.0
      %1095 = vmatpush1.msra.mxu0 0.0
      %1096 = vmatprep.subr.mxu0 0.0
      %1097 = vmatpush1.msra.mxu0 0.0
      %1098 = vmatprep.subr.mxu0 0.0
      %1099 = vmatpush1.msra.mxu0 0.0
      %1100 = vmatprep.subr.mxu0 0.0
      %1101 = vmatpush1.msra.mxu0 0.0
      %1102 = vmatprep.subr.mxu0 0.0
      %1103 = vmatpush1.msra.mxu0 0.0
      %1104 = vmatprep.mubr.f32.mxu0 0.0
      %1105 = vmatmul.mubr.f32.gmra.mrb[0].mxu0 %v897
      %v1106 = vpop.f32.mrb[0].mxu0
      %v1107 = vadd.f32 %v894, %v1106
      %v1108 = vpop.f32.mrb[0].mxu0
      %1109 = vmatprep.mubr.f32.mxu0 0.0
      %1110 = vmatmul.mubr.f32.gmra.mrb[0].mxu0 %v900
      %v1111 = vpop.f32.mrb[0].mxu0
      %v1112 = vadd.f32 %v894, %v1111
      %v1113 = vpop.f32.mrb[0].mxu0
      %1114 = vmatprep.mubr.f32.mxu0 0.0
      %1115 = vmatmul.mubr.f32.gmra.mrb[0].mxu0 %v903
      %v1116 = vpop.f32.mrb[0].mxu0
      %v1117 = vadd.f32 %v894, %v1116
      %v1118 = vpop.f32.mrb[0].mxu0
      %1119 = vmatprep.mubr.f32.mxu0 0.0
      %1120 = vmatmul.mubr.f32.gmra.mrb[0].mxu0 %v906
      %v1121 = vpop.f32.mrb[0].mxu0
      %v1122 = vadd.f32 %v894, %v1121
      %v1123 = vpop.f32.mrb[0].mxu0
      %1124 = vmatprep.mubr.f32.mxu0 0.0
      %1125 = vmatmul.mubr.f32.gmra.mrb[0].mxu0 %v909
      %v1126 = vpop.f32.mrb[0].mxu0
      %v1127 = vadd.f32 %v894, %v1126
      %v1128 = vpop.f32.mrb[0].mxu0
      %1129 = vmatprep.mubr.f32.mxu0 0.0
      %1130 = vmatmul.mubr.f32.gmra.mrb[0].mxu0 %v912
      %v1131 = vpop.f32.mrb[0].mxu0
      %v1132 = vadd.f32 %v894, %v1131
      %v1133 = vpop.f32.mrb[0].mxu0
      %1134 = vmatprep.mubr.f32.mxu0 0.0
      %1135 = vmatmul.mubr.f32.gmra.mrb[0].mxu0 %v915
      %v1136 = vpop.f32.mrb[0].mxu0
      %v1137 = vadd.f32 %v894, %v1136
      %v1138 = vpop.f32.mrb[0].mxu0
      %1139 = vmatprep.mubr.f32.mxu0 0.0
      %1140 = vmatmul.mubr.f32.gmra.mrb[0].mxu0 %v918
      %v1141 = vpop.f32.mrb[0].mxu0
      %v1142 = vadd.f32 %v894, %v1141
      %v1143 = vpop.f32.mrb[0].mxu0
      %1144 = vmatprep.mubr.f32.mxu0 0.0
      %1145 = vmatmul.mubr.f32.gmra.mrb[0].mxu0 %v921
      %v1146 = vpop.f32.mrb[0].mxu0
      %v1147 = vadd.f32 %v894, %v1146
      %v1148 = vpop.f32.mrb[0].mxu0
      %1149 = vmatprep.mubr.f32.mxu0 0.0
      %1150 = vmatmul.mubr.f32.gmra.mrb[0].mxu0 %v924
      %v1151 = vpop.f32.mrb[0].mxu0
      %v1152 = vadd.f32 %v894, %v1151
      %v1153 = vpop.f32.mrb[0].mxu0
      %1154 = vmatprep.mubr.f32.mxu0 0.0
      %1155 = vmatmul.mubr.f32.gmra.mrb[0].mxu0 %v927
      %v1156 = vpop.f32.mrb[0].mxu0
      %v1157 = vadd.f32 %v894, %v1156
      %v1158 = vpop.f32.mrb[0].mxu0
      %1159 = vmatprep.mubr.f32.mxu0 0.0
      %1160 = vmatmul.mubr.f32.gmra.mrb[0].mxu0 %v930
      %v1161 = vpop.f32.mrb[0].mxu0
      %v1162 = vadd.f32 %v894, %v1161
      %v1163 = vpop.f32.mrb[0].mxu0
      %1164 = vmatprep.mubr.f32.mxu0 0.0
      %1165 = vmatmul.mubr.f32.gmra.mrb[0].mxu0 %v933
      %v1166 = vpop.f32.mrb[0].mxu0
      %v1167 = vadd.f32 %v894, %v1166
      %v1168 = vpop.f32.mrb[0].mxu0
      %1169 = vmatprep.mubr.f32.mxu0 0.0
      %1170 = vmatmul.mubr.f32.gmra.mrb[0].mxu0 %v936
      %v1171 = vpop.f32.mrb[0].mxu0
      %v1172 = vadd.f32 %v894, %v1171
      %v1173 = vpop.f32.mrb[0].mxu0
      %1174 = vmatprep.mubr.f32.mxu0 0.0
      %1175 = vmatmul.mubr.f32.gmra.mrb[0].mxu0 %v939
      %v1176 = vpop.f32.mrb[0].mxu0
      %v1177 = vadd.f32 %v894, %v1176
      %v1178 = vpop.f32.mrb[0].mxu0
      %1179 = vmatprep.mubr.f32.mxu0 0.0
      %1180 = vmatmul.mubr.f32.gmra.mrb[0].mxu0 %v942
      %v1181 = vpop.f32.mrb[0].mxu0
      %v1182 = vadd.f32 %v894, %v1181
      %v1183 = vpop.f32.mrb[0].mxu0
      %1184 = vmatprep.mubr.f32.mxu0 0.0
      %1185 = vmatmul.mubr.f32.gmra.mrb[0].mxu0 %v945
      %v1186 = vpop.f32.mrb[0].mxu0
      %v1187 = vadd.f32 %v894, %v1186
      %v1188 = vpop.f32.mrb[0].mxu0
      %1189 = vmatprep.mubr.f32.mxu0 0.0
      %1190 = vmatmul.mubr.f32.gmra.mrb[0].mxu0 %v948
      %v1191 = vpop.f32.mrb[0].mxu0
      %v1192 = vadd.f32 %v894, %v1191
      %v1193 = vpop.f32.mrb[0].mxu0
      %1194 = vmatprep.mubr.f32.mxu0 0.0
      %1195 = vmatmul.mubr.f32.gmra.mrb[0].mxu0 %v951
      %v1196 = vpop.f32.mrb[0].mxu0
      %v1197 = vadd.f32 %v894, %v1196
      %v1198 = vpop.f32.mrb[0].mxu0
      %1199 = vmatprep.mubr.f32.mxu0 0.0
      %1200 = vmatmul.mubr.f32.gmra.mrb[0].mxu0 %v954
      %v1201 = vpop.f32.mrb[0].mxu0
      %v1202 = vadd.f32 %v894, %v1201
      %v1203 = vpop.f32.mrb[0].mxu0
      %1204 = vmatprep.mubr.f32.mxu0 0.0
      %1205 = vmatmul.mubr.f32.gmra.mrb[0].mxu0 %v957
      %v1206 = vpop.f32.mrb[0].mxu0
      %v1207 = vadd.f32 %v894, %v1206
      %v1208 = vpop.f32.mrb[0].mxu0
      %1209 = vmatprep.mubr.f32.mxu0 0.0
      %1210 = vmatmul.mubr.f32.gmra.mrb[0].mxu0 %v960
      %v1211 = vpop.f32.mrb[0].mxu0
      %v1212 = vadd.f32 %v894, %v1211
      %v1213 = vpop.f32.mrb[0].mxu0
      %1214 = vmatprep.mubr.f32.mxu0 0.0
      %1215 = vmatmul.mubr.f32.gmra.mrb[0].mxu0 %v963
      %v1216 = vpop.f32.mrb[0].mxu0
      %v1217 = vadd.f32 %v894, %v1216
      %v1218 = vpop.f32.mrb[0].mxu0
      %1219 = vmatprep.mubr.f32.mxu0 0.0
      %1220 = vmatmul.mubr.f32.gmra.mrb[0].mxu0 %v966
      %v1221 = vpop.f32.mrb[0].mxu0
      %v1222 = vadd.f32 %v894, %v1221
      %v1223 = vpop.f32.mrb[0].mxu0
      %1224 = vmatprep.mubr.f32.mxu0 0.0
      %1225 = vmatmul.mubr.f32.gmra.mrb[0].mxu0 %v969
      %v1226 = vpop.f32.mrb[0].mxu0
      %v1227 = vadd.f32 %v894, %v1226
      %v1228 = vpop.f32.mrb[0].mxu0
      %1229 = vmatprep.mubr.f32.mxu0 0.0
      %1230 = vmatmul.mubr.f32.gmra.mrb[0].mxu0 %v972
      %v1231 = vpop.f32.mrb[0].mxu0
      %v1232 = vadd.f32 %v894, %v1231
      %v1233 = vpop.f32.mrb[0].mxu0
      %1234 = vmatprep.mubr.f32.mxu0 0.0
      %1235 = vmatmul.mubr.f32.gmra.mrb[0].mxu0 %v975
      %v1236 = vpop.f32.mrb[0].mxu0
      %v1237 = vadd.f32 %v894, %v1236
      %v1238 = vpop.f32.mrb[0].mxu0
      %1239 = vmatprep.mubr.f32.mxu0 0.0
      %1240 = vmatmul.mubr.f32.gmra.mrb[0].mxu0 %v978
      %v1241 = vpop.f32.mrb[0].mxu0
      %v1242 = vadd.f32 %v894, %v1241
      %v1243 = vpop.f32.mrb[0].mxu0
      %1244 = vmatprep.mubr.f32.mxu0 0.0
      %1245 = vmatmul.mubr.f32.gmra.mrb[0].mxu0 %v981
      %v1246 = vpop.f32.mrb[0].mxu0
      %v1247 = vadd.f32 %v894, %v1246
      %v1248 = vpop.f32.mrb[0].mxu0
      %1249 = vmatprep.mubr.f32.mxu0 0.0
      %1250 = vmatmul.mubr.f32.gmra.mrb[0].mxu0 %v984
      %v1251 = vpop.f32.mrb[0].mxu0
      %v1252 = vadd.f32 %v894, %v1251
      %v1253 = vpop.f32.mrb[0].mxu0
      %1254 = vmatprep.mubr.f32.mxu0 0.0
      %1255 = vmatmul.mubr.f32.gmra.mrb[0].mxu0 %v987
      %v1256 = vpop.f32.mrb[0].mxu0
      %v1257 = vadd.f32 %v894, %v1256
      %v1258 = vpop.f32.mrb[0].mxu0
      %1259 = vmatprep.mubr.f32.mxu0 0.0
      %1260 = vmatmul.mubr.f32.gmra.mrb[0].mxu0 %v990
      %v1261 = vpop.f32.mrb[0].mxu0
      %v1262 = vadd.f32 %v894, %v1261
      %v1263 = vpop.f32.mrb[0].mxu0
      %1264 = vmatprep.mubr.f32.mxu0 0.0
      %1265 = vmatmul.mubr.f32.gmra.mrb[0].mxu0 %v993
      %v1266 = vpop.f32.mrb[0].mxu0
      %v1267 = vadd.f32 %v894, %v1266
      %v1268 = vpop.f32.mrb[0].mxu0
      %1269 = vmatprep.mubr.f32.mxu0 0.0
      %1270 = vmatmul.mubr.f32.gmra.mrb[0].mxu0 %v996
      %v1271 = vpop.f32.mrb[0].mxu0
      %v1272 = vadd.f32 %v894, %v1271
      %v1273 = vpop.f32.mrb[0].mxu0
      %1274 = vmatprep.mubr.f32.mxu0 0.0
      %1275 = vmatmul.mubr.f32.gmra.mrb[0].mxu0 %v999
      %v1276 = vpop.f32.mrb[0].mxu0
      %v1277 = vadd.f32 %v894, %v1276
      %v1278 = vpop.f32.mrb[0].mxu0
      %1279 = vmatprep.mubr.f32.mxu0 0.0
      %1280 = vmatmul.mubr.f32.gmra.mrb[0].mxu0 %v1002
      %v1281 = vpop.f32.mrb[0].mxu0
      %v1282 = vadd.f32 %v894, %v1281
      %v1283 = vpop.f32.mrb[0].mxu0
      %1284 = vmatprep.mubr.f32.mxu0 0.0
      %1285 = vmatmul.mubr.f32.gmra.mrb[0].mxu0 %v1005
      %v1286 = vpop.f32.mrb[0].mxu0
      %v1287 = vadd.f32 %v894, %v1286
      %v1288 = vpop.f32.mrb[0].mxu0
      %1289 = vmatprep.mubr.f32.mxu0 0.0
      %1290 = vmatmul.mubr.f32.gmra.mrb[0].mxu0 %v1008
      %v1291 = vpop.f32.mrb[0].mxu0
      %v1292 = vadd.f32 %v894, %v1291
      %v1293 = vpop.f32.mrb[0].mxu0
      %1294 = vmatprep.mubr.f32.mxu0 0.0
      %1295 = vmatmul.mubr.f32.gmra.mrb[0].mxu0 %v1011
      %v1296 = vpop.f32.mrb[0].mxu0
      %v1297 = vadd.f32 %v894, %v1296
      %v1298 = vpop.f32.mrb[0].mxu0
      %1299 = vmatprep.mubr.f32.mxu0 0.0
      %1300 = vmatmul.mubr.f32.gmra.mrb[0].mxu0 %v1014
      %v1301 = vpop.f32.mrb[0].mxu0
      %v1302 = vadd.f32 %v894, %v1301
      %v1303 = vpop.f32.mrb[0].mxu0
      %1304 = vmatprep.mubr.f32.mxu0 0.0
      %1305 = vmatmul.mubr.f32.gmra.mrb[0].mxu0 %v1017
      %v1306 = vpop.f32.mrb[0].mxu0
      %v1307 = vadd.f32 %v894, %v1306
      %v1308 = vpop.f32.mrb[0].mxu0
      %1309 = vmatprep.mubr.f32.mxu0 0.0
      %1310 = vmatmul.mubr.f32.gmra.mrb[0].mxu0 %v1020
      %v1311 = vpop.f32.mrb[0].mxu0
      %v1312 = vadd.f32 %v894, %v1311
      %v1313 = vpop.f32.mrb[0].mxu0
      %1314 = vmatprep.mubr.f32.mxu0 0.0
      %1315 = vmatmul.mubr.f32.gmra.mrb[0].mxu0 %v1023
      %v1316 = vpop.f32.mrb[0].mxu0
      %v1317 = vadd.f32 %v894, %v1316
      %v1318 = vpop.f32.mrb[0].mxu0
      %1319 = vmatprep.mubr.f32.mxu0 0.0
      %1320 = vmatmul.mubr.f32.gmra.mrb[0].mxu0 %v1026
      %v1321 = vpop.f32.mrb[0].mxu0
      %v1322 = vadd.f32 %v894, %v1321
      %v1323 = vpop.f32.mrb[0].mxu0
      %1324 = vmatprep.mubr.f32.mxu0 0.0
      %1325 = vmatmul.mubr.f32.gmra.mrb[0].mxu0 %v1029
      %v1326 = vpop.f32.mrb[0].mxu0
      %v1327 = vadd.f32 %v894, %v1326
      %v1328 = vpop.f32.mrb[0].mxu0
      %1329 = vmatprep.mubr.f32.mxu0 0.0
      %1330 = vmatmul.mubr.f32.gmra.mrb[0].mxu0 %v1032
      %v1331 = vpop.f32.mrb[0].mxu0
      %v1332 = vadd.f32 %v894, %v1331
      %v1333 = vpop.f32.mrb[0].mxu0
      %1334 = vmatprep.mubr.f32.mxu0 0.0
      %1335 = vmatmul.mubr.f32.gmra.mrb[0].mxu0 %v1035
      %v1336 = vpop.f32.mrb[0].mxu0
      %v1337 = vadd.f32 %v894, %v1336
      %v1338 = vpop.f32.mrb[0].mxu0
      %1339 = vmatprep.mubr.f32.mxu0 0.0
      %1340 = vmatmul.mubr.f32.gmra.mrb[0].mxu0 %v1038
      %v1341 = vpop.f32.mrb[0].mxu0
      %v1342 = vadd.f32 %v894, %v1341
      %v1343 = vpop.f32.mrb[0].mxu0
      %1344 = vdwg.mxu0
      %1345 = vst [vmem:[%s145] sm:$0xff] %v1107
      %1346 = vst [vmem:[%s145 + $0x8] sm:$0xff] %v1112
      %1347 = vst [vmem:[%s145 + $0x10] sm:$0xff] %v1117
      %1348 = vst [vmem:[%s145 + $0x18] sm:$0xff] %v1122
      %1349 = vst [vmem:[%s145 + $0x20] sm:$0xff] %v1127
      %1350 = vst [vmem:[%s145 + $0x28] sm:$0xff] %v1132
      %1351 = vst [vmem:[%s145 + $0x30] sm:$0xff] %v1137
      %1352 = vst [vmem:[%s145 + $0x38] sm:$0xff] %v1142
      %1353 = vst [vmem:[%s145 + $0x40] sm:$0xff] %v1147
      %1354 = vst [vmem:[%s145 + $0x48] sm:$0xff] %v1152
      %1355 = vst [vmem:[%s145 + $0x50] sm:$0xff] %v1157
      %1356 = vst [vmem:[%s145 + $0x58] sm:$0xff] %v1162
      %1357 = vst [vmem:[%s145 + $0x60] sm:$0xff] %v1167
      %1358 = vst [vmem:[%s145 + $0x68] sm:$0xff] %v1172
      %1359 = vst [vmem:[%s145 + $0x70] sm:$0xff] %v1177
      %1360 = vst [vmem:[%s145 + $0x78] sm:$0xff] %v1182
      %1361 = vst [vmem:[%s145 + $0x80] sm:$0xff] %v1187
      %1362 = vst [vmem:[%s145 + $0x88] sm:$0xff] %v1192
      %1363 = vst [vmem:[%s145 + $0x90] sm:$0xff] %v1197
      %1364 = vst [vmem:[%s145 + $0x98] sm:$0xff] %v1202
      %1365 = vst [vmem:[%s145 + $0xa0] sm:$0xff] %v1207
      %1366 = vst [vmem:[%s145 + $0xa8] sm:$0xff] %v1212
      %1367 = vst [vmem:[%s145 + $0xb0] sm:$0xff] %v1217
      %1368 = vst [vmem:[%s145 + $0xb8] sm:$0xff] %v1222
      %1369 = vst [vmem:[%s145 + $0xc0] sm:$0xff] %v1227
      %1370 = vst [vmem:[%s145 + $0xc8] sm:$0xff] %v1232
      %1371 = vst [vmem:[%s145 + $0xd0] sm:$0xff] %v1237
      %1372 = vst [vmem:[%s145 + $0xd8] sm:$0xff] %v1242
      %1373 = vst [vmem:[%s145 + $0xe0] sm:$0xff] %v1247
      %1374 = vst [vmem:[%s145 + $0xe8] sm:$0xff] %v1252
      %1375 = vst [vmem:[%s145 + $0xf0] sm:$0xff] %v1257
      %1376 = vst [vmem:[%s145 + $0xf8] sm:$0xff] %v1262
      %1377 = vst [vmem:[%s145 + $0x100] sm:$0xff] %v1267
      %1378 = vst [vmem:[%s145 + $0x108] sm:$0xff] %v1272
      %1379 = vst [vmem:[%s145 + $0x110] sm:$0xff] %v1277
      %1380 = vst [vmem:[%s145 + $0x118] sm:$0xff] %v1282
      %1381 = vst [vmem:[%s145 + $0x120] sm:$0xff] %v1287
      %1382 = vst [vmem:[%s145 + $0x128] sm:$0xff] %v1292
      %1383 = vst [vmem:[%s145 + $0x130] sm:$0xff] %v1297
      %1384 = vst [vmem:[%s145 + $0x138] sm:$0xff] %v1302
      %1385 = vst [vmem:[%s145 + $0x140] sm:$0xff] %v1307
      %1386 = vst [vmem:[%s145 + $0x148] sm:$0xff] %v1312
      %1387 = vst [vmem:[%s145 + $0x150] sm:$0xff] %v1317
      %1388 = vst [vmem:[%s145 + $0x158] sm:$0xff] %v1322
      %1389 = vst [vmem:[%s145 + $0x160] sm:$0xff] %v1327
      %1390 = vst [vmem:[%s145 + $0x168] sm:$0xff] %v1332
      %1391 = vst [vmem:[%s145 + $0x170] sm:$0xff] %v1337
      %1392 = vst [vmem:[%s145 + $0x178] sm:$0xff] %v1342
      %s1393 = smul.u32 48, %s13
      %p1394 = scmp.lt.s32.totalorder %s1393, 95
      %s1395 = scalar_select %p1394, %s1393, 95
      %s1396 = smul.addr %s1395, 8
      %s1397 = scalar_lea.vmem %s2, %s1396
      // Predicated region
      $region29: #{combined_model_forward.1} parent=27 // pred_check
        %p1398 = pneg %p78
      $region30: #{combined_model_forward.1} parent=27 // pred_check_branch
        %1400 = sbr.rel (%p1398) target = $region32
      $region31: #{combined_model_forward.1} parent=27 // pred_region
        %s1401 = smul.u32 48, %s13
      $region32: #{combined_model_forward.1} parent=27 // pred_fallthru
        _
    $region28: #{combined_model_forward.1} parent=5 // pred_fallthru
      _
    %p1402 = scmp.le.s32.totalorder 2, %s8
    // Predicated region
    $region33: #{combined_model_forward.1} parent=5 // pred_check
      %p1403 = pneg %p1402
    $region34: #{combined_model_forward.1} parent=5 // pred_check_branch
      %1405 = sbr.rel (%p1403) target = $region36
    $region35: #{combined_model_forward.1} parent=5 // pred_region
      %s1406 = ssub.s32 %s8, 2
      // Predicated region
      $region37: #{combined_model_forward.1} parent=35 // pred_check
        %p1407 = pneg %p84
      $region38: #{combined_model_forward.1} parent=35 // pred_check_branch
        %1409 = sbr.rel (%p1407) target = $region40
      $region39: #{combined_model_forward.1} parent=35 // pred_region
        %s1410 = smul.u32 48, %s14
        %p1411 = scmp.lt.s32.totalorder %s1410, 95
        %s1412 = scalar_select %p1411, %s1410, 95
        %s1413 = smul.addr %s1412, 8
        %s1414 = scalar_lea.vmem %s2, %s1413
      $region40: #{combined_model_forward.1} parent=35 // pred_fallthru
        _
    $region36: #{combined_model_forward.1} parent=5 // pred_fallthru
      _
  $region6: #{combined_model_forward.1} parent=0 // loop_footer
    %s12 = sadd.s32 1, %s8
  $region7: #{combined_model_forward.1} parent=0 // loop_footer_branch
    %7 = sbr.rel target = $region3
  $region8: #{combined_model_forward.1} parent=0 // loop_exit
    _

</llo_original>
